<compile_context>
chip_gen: v7x
topology: tpu7x:2x2x1
jax: 0.10.0
libtpu: 0.0.40
codegen_flags: <defaults>
</compile_context>

<pallas_src>
import functools

import jax
import jax.numpy as jnp
from jax.experimental import pallas as pl
from jax.experimental.pallas import tpu as pltpu


_TILE_E_TARGET = 512   # edge-row tile (sublane axis)
_TILE_N_TARGET = 256   # node-row tile


def _pick_tile(total, target):
    """Largest multiple-of-8 divisor of `total` that is <= target (else total)."""
    if total <= target:
        return total
    for t in range(target, 7, -1):
        if total % t == 0 and t % 8 == 0:
            return t
    return total


# ----------------------------------------------------------------------------
# Kernel 1: per-edge attention mechanism + edge_fc residual (tiled over E).
# ----------------------------------------------------------------------------
def _edge_kernel(h_src_ref, h_dst_ref, eh_ref,
                 W1s_ref, b1s_ref, W2bd_ref, b2_ref,
                 Wedge_ref, bedge_ref,
                 ag_ref, new_edge_ref):
    eh = eh_ref[...]                                               # (TE, De)

    # a[e] = <h_src[e], h_dst[e]>
    a = jnp.sum(h_src_ref[...] * h_dst_ref[...], axis=-1, keepdims=True)  # (TE, 1)

    # Fused per-head MLP: one wide matmul for all M heads, then a single
    # block-diagonal matmul produces all M logits at once.
    t = jnp.maximum(
        jnp.dot(eh, W1s_ref[...], preferred_element_type=jnp.float32)
        + b1s_ref[...], 0.0)                                       # (TE, M*Dn)
    logits = jnp.dot(t, W2bd_ref[...],
                     preferred_element_type=jnp.float32) + b2_ref[...]   # (TE, M)
    g = jax.nn.sigmoid(logits)                                     # (TE, M)

    # Combined attention slab: columns 0..M-1 = g, column M = a.
    ag_ref[...] = jnp.concatenate([g, a], axis=1)                  # (TE, M+1)

    # edge_fc (Linear + ReLU) with residual connection.
    new_edge_ref[...] = jnp.maximum(
        jnp.dot(eh, Wedge_ref[...], preferred_element_type=jnp.float32)
        + bedge_ref[...], 0.0) + eh


# ----------------------------------------------------------------------------
# Kernel 2: per-node reduce (dual softmax) + node_out_fc + node_fc (tiled over N).
# ----------------------------------------------------------------------------
def _node_kernel(ag_ref, feat_ref,
                 Watt_ref, Wrel_ref,
                 Wout_ref, bout_ref, Wnode_ref, bnode_ref,
                 out_ref):
    M = ag_ref.shape[0] - 1
    feat = feat_ref[...]                                           # (TN, Dn)

    def softmax_rowsum(x):
        # sum_d softmax(x)[., d]  (kept explicit to preserve reference semantics)
        e = jnp.exp(x - jnp.max(x, axis=1, keepdims=True))
        s = jnp.sum(e, axis=1, keepdims=True)
        return s * pl.reciprocal(s, approx=True)                   # (TN, 1)

    # h_att: hj == feat (message is dst feature), so the alpha-weighted sum
    # collapses to (sum_d alpha) * feat, then ONE matmul with (sum_k W_k / K).
    h_att = jnp.dot(feat * softmax_rowsum(ag_ref[M]), Watt_ref[...],
                    preferred_element_type=jnp.float32)            # (TN, Dn)

    # h_rel: per-head aggregate, then ONE (TN, M*Dn)@(M*Dn, Dn) matmul.
    agg = jnp.concatenate(
        [feat * softmax_rowsum(ag_ref[m]) for m in range(M)], axis=1)  # (TN, M*Dn)
    h_rel = jnp.dot(agg, Wrel_ref[...], preferred_element_type=jnp.float32)

    # node_out_fc (Linear(2*Dn -> Dn) + ReLU)
    h_cat = jnp.concatenate([h_att, h_rel], axis=1)                # (TN, 2*Dn)
    h = jnp.maximum(
        jnp.dot(h_cat, Wout_ref[...], preferred_element_type=jnp.float32)
        + bout_ref[...], 0.0)

    # node_fc (Linear + ReLU) with residual connection.
    out_ref[...] = jnp.maximum(
        jnp.dot(h, Wnode_ref[...], preferred_element_type=jnp.float32)
        + bnode_ref[...], 0.0) + feat


# ----------------------------------------------------------------------------
# Wrapper: glue gathers / tiny param re-packing + two tiled pallas_calls.
# ----------------------------------------------------------------------------
@functools.partial(jax.jit, static_argnums=(5,))
def layer_rgat_forward(params, src, dst, node_features, edge_features, D):
    N, Dn = node_features.shape
    E, De = edge_features.shape
    M = params["rel_att_W"].shape[0]
    K = params["node_att_W"].shape[0]
    f32 = jnp.float32

    # --- tiny parameter re-packing (constant-sized XLA glue) ------------------
    W1s = jnp.transpose(params["rel_att_W1"], (1, 0, 2)).reshape(De, M * Dn)
    b1s = params["rel_att_b1"].reshape(1, M * Dn)
    # Block-diagonal W2 so all M logits come from one matmul.
    W2bd = (params["rel_att_W2"][:, 0, :, None]
            * jnp.eye(M, dtype=f32)[:, None, :]).reshape(M * Dn, M)
    b2f = params["rel_att_b2"].reshape(1, M)
    Watt = jnp.sum(params["node_att_W"], axis=0) / K               # (Dn, Dn)
    Wrel = params["rel_att_W"].reshape(M * Dn, Dn) / M             # (M*Dn, Dn)

    # --- glue gathers ---------------------------------------------------------
    h_src = node_features[src]                                     # (E, Dn)
    h_dst = node_features[dst]                                     # (E, Dn)

    TILE_E = _pick_tile(E, _TILE_E_TARGET)
    TILE_N = _pick_tile(N, _TILE_N_TARGET)

    cparams = pltpu.CompilerParams(dimension_semantics=("parallel",),
                                   vmem_limit_bytes=32 * 1024 * 1024)

    def row_spec(tile, width):
        return pl.BlockSpec((tile, width), lambda i: (i, 0))

    def full_spec(shape):
        return pl.BlockSpec(shape, lambda i: (0,) * len(shape))

    # -------------------- kernel 1: per-edge ---------------------------------
    ag, new_edge = pl.pallas_call(
        _edge_kernel,
        grid=(E // TILE_E,),
        out_shape=(jax.ShapeDtypeStruct((E, M + 1), f32),
                   jax.ShapeDtypeStruct((E, De), f32)),
        in_specs=[row_spec(TILE_E, Dn), row_spec(TILE_E, Dn), row_spec(TILE_E, De),
                  full_spec((De, M * Dn)), full_spec((1, M * Dn)),
                  full_spec((M * Dn, M)), full_spec((1, M)),
                  full_spec((De, De)), full_spec((1, De))],
        out_specs=(row_spec(TILE_E, M + 1), row_spec(TILE_E, De)),
        compiler_params=cparams,
    )(h_src, h_dst, edge_features, W1s, b1s, W2bd, b2f,
      params["Wedge"], params["bedge"])

    # Mailbox glue (edges sorted by destination: e = dst*D + d).  Only the tiny
    # (E, M+1) attention slab is reshuffled; no D-times node-feature mailbox.
    ag_mb = jnp.transpose(ag.reshape(N, D, M + 1), (2, 0, 1))      # (M+1, N, D)

    # -------------------- kernel 2: per-node ---------------------------------
    new_node = pl.pallas_call(
        _node_kernel,
        grid=(N // TILE_N,),
        out_shape=jax.ShapeDtypeStruct((N, Dn), f32),
        in_specs=[pl.BlockSpec((M + 1, TILE_N, D), lambda i: (0, i, 0)),
                  row_spec(TILE_N, Dn),
                  full_spec((Dn, Dn)), full_spec((M * Dn, Dn)),
                  full_spec((2 * Dn, Dn)), full_spec((1, Dn)),
                  full_spec((Dn, Dn)), full_spec((1, Dn))],
        out_specs=row_spec(TILE_N, Dn),
        compiler_params=cparams,
    )(ag_mb, node_features, Watt, Wrel,
      params["Wout"], params["bout"], params["Wnode"], params["bnode"])

    return new_node, new_edge


# ----------------------------------------------------------------------------
# Pure-JAX reference (follows the PyTorch code literally) for validation.
# ----------------------------------------------------------------------------
def layer_rgat_reference(params, src, dst, node_features, edge_features, D):
    h, eh = node_features, edge_features
    N, Dn = h.shape
    K = params["node_att_W"].shape[0]
    M = params["rel_att_W"].shape[0]

    a = jnp.sum(h[src] * h[dst], axis=-1)                               # (E,)
    t = jnp.maximum(jnp.einsum("ed,mdn->men", eh, params["rel_att_W1"])
                    + params["rel_att_b1"], 0.0)                        # (M,E,Dn)
    gg = jax.nn.sigmoid(jnp.einsum("men,mn->me", t, params["rel_att_W2"][:, 0, :])
                        + params["rel_att_b2"][:, :, 0])                # (M,E)
    g = gg.T                                                            # (E,M)

    hj = h[dst].reshape(N, D, Dn)
    a_mb = a.reshape(N, D)
    g_mb = g.reshape(N, D, M)

    alpha = jax.nn.softmax(a_mb, axis=1)
    hj5 = hj[:, None, :, None, :]                                       # (N,1,D,1,Dn)
    hw = jnp.matmul(hj5, params["node_att_W"][None, :, None])[:, :, :, 0, :]
    h_att = jnp.sum(jnp.sum(alpha[:, None, :, None] * hw, axis=2), axis=1) / K

    beta = jax.nn.softmax(jnp.transpose(g_mb, (0, 2, 1)), axis=2)       # (N,M,D)
    hwr = jnp.matmul(hj5, params["rel_att_W"][None, :, None])[:, :, :, 0, :]
    h_rel = jnp.sum(jnp.sum(beta[..., None] * hwr, axis=2), axis=1) / M

    h_cat = jnp.concatenate([h_att, h_rel], axis=1)
    hn = jnp.maximum(h_cat @ params["Wout"] + params["bout"], 0.0)
    new_node = jnp.maximum(hn @ params["Wnode"] + params["bnode"], 0.0) + h
    new_edge = jnp.maximum(eh @ params["Wedge"] + params["bedge"], 0.0) + eh
    return new_node, new_edge


if __name__ == "__main__":
    node_dim, edge_dim = 32, 16
    M, K = 2, 3
    N, D = 8, 4            # N nodes, each with in-degree D
    E = N * D

    # Regular graph, edges sorted by destination: edge e = i*D + d has dst=i.
    dst = jnp.repeat(jnp.arange(N, dtype=jnp.int32), D)
    src = (dst + jnp.tile(jnp.arange(1, D + 1, dtype=jnp.int32), N)) % N

    key = jax.random.PRNGKey(0)
    ks = jax.random.split(key, 14)

    def rnd(k, shape, scale=1.0):
        return (scale * jax.random.normal(k, shape)).astype(jnp.float32)

    params = {
        # attention weights (torch: randn, squeezed of singleton broadcast dims)
        "node_att_W": rnd(ks[0], (K, node_dim, node_dim), 0.2),
        "rel_att_W":  rnd(ks[1], (M, node_dim, node_dim), 0.2),
        "rel_att_W1": rnd(ks[2], (M, edge_dim, node_dim), 0.2),
        "rel_att_b1": rnd(ks[3], (M, 1, node_dim), 0.2),
        "rel_att_W2": rnd(ks[4], (M, 1, node_dim), 0.2),   # torch (M, node_dim, 1) transposed
        "rel_att_b2": rnd(ks[5], (M, 1, 1), 0.2),
        # nn.Linear params, stored (in_dim, out_dim)
        "Wout":  rnd(ks[6], (2 * node_dim, node_dim), 0.1),
        "bout":  rnd(ks[7], (1, node_dim), 0.1),
        "Wnode": rnd(ks[8], (node_dim, node_dim), 0.1),
        "bnode": rnd(ks[9], (1, node_dim), 0.1),
        "Wedge": rnd(ks[10], (edge_dim, edge_dim), 0.1),
        "bedge": rnd(ks[11], (1, edge_dim), 0.1),
    }

    node_features = rnd(ks[12], (N, node_dim))
    edge_features = rnd(ks[13], (E, edge_dim))

    new_node, new_edge = layer_rgat_forward(
        params, src, dst, node_features, edge_features, D)
    jax.block_until_ready((new_node, new_edge))

    ref_node, ref_edge = layer_rgat_reference(
        params, src, dst, node_features, edge_features, D)

    assert new_node.shape == (N, node_dim) and new_edge.shape == (E, edge_dim)
    assert jnp.allclose(new_node, ref_node, rtol=1e-3, atol=1e-2), "node mismatch"
    assert jnp.allclose(new_edge, ref_edge, rtol=1e-3, atol=1e-2), "edge mismatch"

    print("KERNEL_OK")
</pallas_src>

<mosaic_0001>
module attributes {stable_mosaic.version = 11 : i64} {
  func.func @_edge_kernel(%arg0: i32, %arg1: memref<32x32xf32, #tpu.memory_space<vmem>>, %arg2: memref<32x32xf32, #tpu.memory_space<vmem>>, %arg3: memref<32x16xf32, #tpu.memory_space<vmem>>, %arg4: memref<16x64xf32, #tpu.memory_space<vmem>>, %arg5: memref<1x64xf32, #tpu.memory_space<vmem>>, %arg6: memref<64x2xf32, #tpu.memory_space<vmem>>, %arg7: memref<1x2xf32, #tpu.memory_space<vmem>>, %arg8: memref<16x16xf32, #tpu.memory_space<vmem>>, %arg9: memref<1x16xf32, #tpu.memory_space<vmem>>, %arg10: memref<32x3xf32, #tpu.memory_space<vmem>>, %arg11: memref<32x16xf32, #tpu.memory_space<vmem>>) attributes {dimension_semantics = [#tpu.dimension_semantics<parallel>], iteration_bounds = array<i64: 1>, scalar_prefetch = 0 : i64, scratch_operands = 0 : i64, tpu.core_type = #tpu.core_type<tc>, window_params = [{transform_indices = @transform_0, window_bounds = array<i64: 32, 32>}, {transform_indices = @transform_1, window_bounds = array<i64: 32, 32>}, {transform_indices = @transform_2, window_bounds = array<i64: 32, 16>}, {pipeline_mode = #tpu.pipeline_mode<synchronous>, transform_indices = @transform_3, window_bounds = array<i64: 16, 64>}, {pipeline_mode = #tpu.pipeline_mode<synchronous>, transform_indices = @transform_4, window_bounds = array<i64: 1, 64>}, {pipeline_mode = #tpu.pipeline_mode<synchronous>, transform_indices = @transform_5, window_bounds = array<i64: 64, 2>}, {pipeline_mode = #tpu.pipeline_mode<synchronous>, transform_indices = @transform_6, window_bounds = array<i64: 1, 2>}, {pipeline_mode = #tpu.pipeline_mode<synchronous>, transform_indices = @transform_7, window_bounds = array<i64: 16, 16>}, {pipeline_mode = #tpu.pipeline_mode<synchronous>, transform_indices = @transform_8, window_bounds = array<i64: 1, 16>}, {transform_indices = @transform_9, window_bounds = array<i64: 32, 3>}, {transform_indices = @transform_10, window_bounds = array<i64: 32, 16>}]} {
    %c0 = arith.constant 0 : index
    %c0_0 = arith.constant 0 : index
    %0 = vector.load %arg3[%c0, %c0_0] : memref<32x16xf32, #tpu.memory_space<vmem>>, vector<32x16xf32>
    %c0_1 = arith.constant 0 : index
    %c0_2 = arith.constant 0 : index
    %1 = vector.load %arg1[%c0_1, %c0_2] : memref<32x32xf32, #tpu.memory_space<vmem>>, vector<32x32xf32>
    %c0_3 = arith.constant 0 : index
    %c0_4 = arith.constant 0 : index
    %2 = vector.load %arg2[%c0_3, %c0_4] : memref<32x32xf32, #tpu.memory_space<vmem>>, vector<32x32xf32>
    %3 = arith.mulf %1, %2 : vector<32x32xf32>
    %cst = arith.constant dense<0.000000e+00> : vector<32xf32>
    %4 = vector.multi_reduction <add>, %3, %cst [1] : vector<32x32xf32> to vector<32xf32>
    %5 = vector.shape_cast %4 : vector<32xf32> to vector<32x1xf32>
    %c0_5 = arith.constant 0 : index
    %c0_6 = arith.constant 0 : index
    %6 = vector.load %arg4[%c0_5, %c0_6] : memref<16x64xf32, #tpu.memory_space<vmem>>, vector<16x64xf32>
    %cst_7 = arith.constant dense<0.000000e+00> : vector<32x64xf32>
    %7 = tpu.matmul %0, %6, %cst_7 {dimension_numbers = #tpu.dot_dimension_numbers<[1], [0], [0], [1], [0, 0, 1, 1], [], []>} : vector<32x16xf32>, vector<16x64xf32>, vector<32x64xf32> -> vector<32x64xf32>
    %c0_8 = arith.constant 0 : index
    %c0_9 = arith.constant 0 : index
    %8 = vector.load %arg5[%c0_8, %c0_9] : memref<1x64xf32, #tpu.memory_space<vmem>>, vector<1x64xf32>
    %9 = vector.broadcast %8 : vector<1x64xf32> to vector<32x64xf32>
    %10 = arith.addf %7, %9 : vector<32x64xf32>
    %cst_10 = arith.constant 0.000000e+00 : f32
    %11 = vector.broadcast %cst_10 : f32 to vector<32x64xf32>
    %12 = arith.maximumf %10, %11 : vector<32x64xf32>
    %c0_11 = arith.constant 0 : index
    %c0_12 = arith.constant 0 : index
    %13 = vector.load %arg6[%c0_11, %c0_12] : memref<64x2xf32, #tpu.memory_space<vmem>>, vector<64x2xf32>
    %cst_13 = arith.constant dense<0.000000e+00> : vector<32x2xf32>
    %14 = tpu.matmul %12, %13, %cst_13 {dimension_numbers = #tpu.dot_dimension_numbers<[1], [0], [0], [1], [0, 0, 1, 1], [], []>} : vector<32x64xf32>, vector<64x2xf32>, vector<32x2xf32> -> vector<32x2xf32>
    %c0_14 = arith.constant 0 : index
    %c0_15 = arith.constant 0 : index
    %15 = vector.load %arg7[%c0_14, %c0_15] : memref<1x2xf32, #tpu.memory_space<vmem>>, vector<1x2xf32>
    %16 = vector.broadcast %15 : vector<1x2xf32> to vector<32x2xf32>
    %17 = arith.addf %14, %16 : vector<32x2xf32>
    %18 = arith.negf %17 : vector<32x2xf32>
    %19 = math.exp %18 : vector<32x2xf32>
    %cst_16 = arith.constant 1.000000e+00 : f32
    %20 = vector.broadcast %cst_16 : f32 to vector<32x2xf32>
    %21 = arith.addf %20, %19 : vector<32x2xf32>
    %22 = arith.divf %20, %21 : vector<32x2xf32>
    %23 = tpu.concatenate %22, %5 in 1 : vector<32x2xf32>, vector<32x1xf32> -> vector<32x3xf32>
    %c0_17 = arith.constant 0 : index
    %c0_18 = arith.constant 0 : index
    %24 = vector.load %arg10[%c0_17, %c0_18] : memref<32x3xf32, #tpu.memory_space<vmem>>, vector<32x3xf32>
    tpu.vector_store %arg10[%c0_17, %c0_18], %23 {strides = array<i32>} : memref<32x3xf32, #tpu.memory_space<vmem>>, vector<32x3xf32>,
    %c0_19 = arith.constant 0 : index
    %c0_20 = arith.constant 0 : index
    %25 = vector.load %arg8[%c0_19, %c0_20] : memref<16x16xf32, #tpu.memory_space<vmem>>, vector<16x16xf32>
    %cst_21 = arith.constant dense<0.000000e+00> : vector<32x16xf32>
    %26 = tpu.matmul %0, %25, %cst_21 {dimension_numbers = #tpu.dot_dimension_numbers<[1], [0], [0], [1], [0, 0, 1, 1], [], []>} : vector<32x16xf32>, vector<16x16xf32>, vector<32x16xf32> -> vector<32x16xf32>
    %c0_22 = arith.constant 0 : index
    %c0_23 = arith.constant 0 : index
    %27 = vector.load %arg9[%c0_22, %c0_23] : memref<1x16xf32, #tpu.memory_space<vmem>>, vector<1x16xf32>
    %28 = vector.broadcast %27 : vector<1x16xf32> to vector<32x16xf32>
    %29 = arith.addf %26, %28 : vector<32x16xf32>
    %cst_24 = arith.constant 0.000000e+00 : f32
    %30 = vector.broadcast %cst_24 : f32 to vector<32x16xf32>
    %31 = arith.maximumf %29, %30 : vector<32x16xf32>
    %32 = arith.addf %31, %0 : vector<32x16xf32>
    %c0_25 = arith.constant 0 : index
    %c0_26 = arith.constant 0 : index
    %33 = vector.load %arg11[%c0_25, %c0_26] : memref<32x16xf32, #tpu.memory_space<vmem>>, vector<32x16xf32>
    tpu.vector_store %arg11[%c0_25, %c0_26], %32 {strides = array<i32>} : memref<32x16xf32, #tpu.memory_space<vmem>>, vector<32x16xf32>,
    return
  }
  func.func @transform_0(%arg0: i32) -> (i32, i32) {
    %c0_i32 = arith.constant 0 : i32
    %c0_i32_0 = arith.constant 0 : i32
    return %arg0, %c0_i32 : i32, i32
  }
  func.func @transform_1(%arg0: i32) -> (i32, i32) {
    %c0_i32 = arith.constant 0 : i32
    %c0_i32_0 = arith.constant 0 : i32
    return %arg0, %c0_i32 : i32, i32
  }
  func.func @transform_2(%arg0: i32) -> (i32, i32) {
    %c0_i32 = arith.constant 0 : i32
    %c0_i32_0 = arith.constant 0 : i32
    return %arg0, %c0_i32 : i32, i32
  }
  func.func @transform_3(%arg0: i32) -> (i32, i32) {
    %c0_i32 = arith.constant 0 : i32
    %c0_i32_0 = arith.constant 0 : i32
    %c0_i32_1 = arith.constant 0 : i32
    return %c0_i32, %c0_i32_0 : i32, i32
  }
  func.func @transform_4(%arg0: i32) -> (i32, i32) {
    %c0_i32 = arith.constant 0 : i32
    %c0_i32_0 = arith.constant 0 : i32
    %c0_i32_1 = arith.constant 0 : i32
    return %c0_i32, %c0_i32_0 : i32, i32
  }
  func.func @transform_5(%arg0: i32) -> (i32, i32) {
    %c0_i32 = arith.constant 0 : i32
    %c0_i32_0 = arith.constant 0 : i32
    %c0_i32_1 = arith.constant 0 : i32
    return %c0_i32, %c0_i32_0 : i32, i32
  }
  func.func @transform_6(%arg0: i32) -> (i32, i32) {
    %c0_i32 = arith.constant 0 : i32
    %c0_i32_0 = arith.constant 0 : i32
    %c0_i32_1 = arith.constant 0 : i32
    return %c0_i32, %c0_i32_0 : i32, i32
  }
  func.func @transform_7(%arg0: i32) -> (i32, i32) {
    %c0_i32 = arith.constant 0 : i32
    %c0_i32_0 = arith.constant 0 : i32
    %c0_i32_1 = arith.constant 0 : i32
    return %c0_i32, %c0_i32_0 : i32, i32
  }
  func.func @transform_8(%arg0: i32) -> (i32, i32) {
    %c0_i32 = arith.constant 0 : i32
    %c0_i32_0 = arith.constant 0 : i32
    %c0_i32_1 = arith.constant 0 : i32
    return %c0_i32, %c0_i32_0 : i32, i32
  }
  func.func @transform_9(%arg0: i32) -> (i32, i32) {
    %c0_i32 = arith.constant 0 : i32
    %c0_i32_0 = arith.constant 0 : i32
    return %arg0, %c0_i32 : i32, i32
  }
  func.func @transform_10(%arg0: i32) -> (i32, i32) {
    %c0_i32 = arith.constant 0 : i32
    %c0_i32_0 = arith.constant 0 : i32
    return %arg0, %c0_i32 : i32, i32
  }
}

module attributes {stable_mosaic.version = 11 : i64} {
  func.func @_node_kernel(%arg0: i32, %arg1: memref<3x8x4xf32, #tpu.memory_space<vmem>>, %arg2: memref<8x32xf32, #tpu.memory_space<vmem>>, %arg3: memref<32x32xf32, #tpu.memory_space<vmem>>, %arg4: memref<64x32xf32, #tpu.memory_space<vmem>>, %arg5: memref<64x32xf32, #tpu.memory_space<vmem>>, %arg6: memref<1x32xf32, #tpu.memory_space<vmem>>, %arg7: memref<32x32xf32, #tpu.memory_space<vmem>>, %arg8: memref<1x32xf32, #tpu.memory_space<vmem>>, %arg9: memref<8x32xf32, #tpu.memory_space<vmem>>) attributes {dimension_semantics = [#tpu.dimension_semantics<parallel>], iteration_bounds = array<i64: 1>, scalar_prefetch = 0 : i64, scratch_operands = 0 : i64, tpu.core_type = #tpu.core_type<tc>, window_params = [{transform_indices = @transform_0, window_bounds = array<i64: 3, 8, 4>}, {transform_indices = @transform_1, window_bounds = array<i64: 8, 32>}, {pipeline_mode = #tpu.pipeline_mode<synchronous>, transform_indices = @transform_2, window_bounds = array<i64: 32, 32>}, {pipeline_mode = #tpu.pipeline_mode<synchronous>, transform_indices = @transform_3, window_bounds = array<i64: 64, 32>}, {pipeline_mode = #tpu.pipeline_mode<synchronous>, transform_indices = @transform_4, window_bounds = array<i64: 64, 32>}, {pipeline_mode = #tpu.pipeline_mode<synchronous>, transform_indices = @transform_5, window_bounds = array<i64: 1, 32>}, {pipeline_mode = #tpu.pipeline_mode<synchronous>, transform_indices = @transform_6, window_bounds = array<i64: 32, 32>}, {pipeline_mode = #tpu.pipeline_mode<synchronous>, transform_indices = @transform_7, window_bounds = array<i64: 1, 32>}, {transform_indices = @transform_8, window_bounds = array<i64: 8, 32>}]} {
    %c0 = arith.constant 0 : index
    %c0_0 = arith.constant 0 : index
    %0 = vector.load %arg2[%c0, %c0_0] : memref<8x32xf32, #tpu.memory_space<vmem>>, vector<8x32xf32>
    %c2 = arith.constant 2 : index
    %c0_1 = arith.constant 0 : index
    %c0_2 = arith.constant 0 : index
    %1 = vector.load %arg1[%c2, %c0_1, %c0_2] : memref<3x8x4xf32, #tpu.memory_space<vmem>>, vector<1x8x4xf32>
    %2 = vector.shape_cast %1 : vector<1x8x4xf32> to vector<8x4xf32>
    %cst = arith.constant dense<0xFF800000> : vector<8xf32>
    %3 = vector.multi_reduction <maximumf>, %2, %cst [1] : vector<8x4xf32> to vector<8xf32>
    %4 = vector.shape_cast %3 : vector<8xf32> to vector<8x1xf32>
    %5 = vector.broadcast %4 : vector<8x1xf32> to vector<8x4xf32>
    %6 = arith.subf %2, %5 : vector<8x4xf32>
    %7 = math.exp %6 : vector<8x4xf32>
    %cst_3 = arith.constant dense<0.000000e+00> : vector<8xf32>
    %8 = vector.multi_reduction <add>, %7, %cst_3 [1] : vector<8x4xf32> to vector<8xf32>
    %9 = vector.shape_cast %8 : vector<8xf32> to vector<8x1xf32>
    %10 = tpu.reciprocal %9 {approx = true} : vector<8x1xf32> -> vector<8x1xf32>
    %11 = arith.mulf %9, %10 : vector<8x1xf32>
    %12 = vector.broadcast %11 : vector<8x1xf32> to vector<8x32xf32>
    %13 = arith.mulf %0, %12 : vector<8x32xf32>
    %c0_4 = arith.constant 0 : index
    %c0_5 = arith.constant 0 : index
    %14 = vector.load %arg3[%c0_4, %c0_5] : memref<32x32xf32, #tpu.memory_space<vmem>>, vector<32x32xf32>
    %cst_6 = arith.constant dense<0.000000e+00> : vector<8x32xf32>
    %15 = tpu.matmul %13, %14, %cst_6 {dimension_numbers = #tpu.dot_dimension_numbers<[1], [0], [0], [1], [0, 0, 1, 1], [], []>} : vector<8x32xf32>, vector<32x32xf32>, vector<8x32xf32> -> vector<8x32xf32>
    %c0_7 = arith.constant 0 : index
    %c0_8 = arith.constant 0 : index
    %c0_9 = arith.constant 0 : index
    %16 = vector.load %arg1[%c0_7, %c0_8, %c0_9] : memref<3x8x4xf32, #tpu.memory_space<vmem>>, vector<1x8x4xf32>
    %17 = vector.shape_cast %16 : vector<1x8x4xf32> to vector<8x4xf32>
    %cst_10 = arith.constant dense<0xFF800000> : vector<8xf32>
    %18 = vector.multi_reduction <maximumf>, %17, %cst_10 [1] : vector<8x4xf32> to vector<8xf32>
    %19 = vector.shape_cast %18 : vector<8xf32> to vector<8x1xf32>
    %20 = vector.broadcast %19 : vector<8x1xf32> to vector<8x4xf32>
    %21 = arith.subf %17, %20 : vector<8x4xf32>
    %22 = math.exp %21 : vector<8x4xf32>
    %cst_11 = arith.constant dense<0.000000e+00> : vector<8xf32>
    %23 = vector.multi_reduction <add>, %22, %cst_11 [1] : vector<8x4xf32> to vector<8xf32>
    %24 = vector.shape_cast %23 : vector<8xf32> to vector<8x1xf32>
    %25 = tpu.reciprocal %24 {approx = true} : vector<8x1xf32> -> vector<8x1xf32>
    %26 = arith.mulf %24, %25 : vector<8x1xf32>
    %27 = vector.broadcast %26 : vector<8x1xf32> to vector<8x32xf32>
    %28 = arith.mulf %0, %27 : vector<8x32xf32>
    %c1 = arith.constant 1 : index
    %c0_12 = arith.constant 0 : index
    %c0_13 = arith.constant 0 : index
    %29 = vector.load %arg1[%c1, %c0_12, %c0_13] : memref<3x8x4xf32, #tpu.memory_space<vmem>>, vector<1x8x4xf32>
    %30 = vector.shape_cast %29 : vector<1x8x4xf32> to vector<8x4xf32>
    %cst_14 = arith.constant dense<0xFF800000> : vector<8xf32>
    %31 = vector.multi_reduction <maximumf>, %30, %cst_14 [1] : vector<8x4xf32> to vector<8xf32>
    %32 = vector.shape_cast %31 : vector<8xf32> to vector<8x1xf32>
    %33 = vector.broadcast %32 : vector<8x1xf32> to vector<8x4xf32>
    %34 = arith.subf %30, %33 : vector<8x4xf32>
    %35 = math.exp %34 : vector<8x4xf32>
    %cst_15 = arith.constant dense<0.000000e+00> : vector<8xf32>
    %36 = vector.multi_reduction <add>, %35, %cst_15 [1] : vector<8x4xf32> to vector<8xf32>
    %37 = vector.shape_cast %36 : vector<8xf32> to vector<8x1xf32>
    %38 = tpu.reciprocal %37 {approx = true} : vector<8x1xf32> -> vector<8x1xf32>
    %39 = arith.mulf %37, %38 : vector<8x1xf32>
    %40 = vector.broadcast %39 : vector<8x1xf32> to vector<8x32xf32>
    %41 = arith.mulf %0, %40 : vector<8x32xf32>
    %42 = tpu.concatenate %28, %41 in 1 : vector<8x32xf32>, vector<8x32xf32> -> vector<8x64xf32>
    %c0_16 = arith.constant 0 : index
    %c0_17 = arith.constant 0 : index
    %43 = vector.load %arg4[%c0_16, %c0_17] : memref<64x32xf32, #tpu.memory_space<vmem>>, vector<64x32xf32>
    %cst_18 = arith.constant dense<0.000000e+00> : vector<8x32xf32>
    %44 = tpu.matmul %42, %43, %cst_18 {dimension_numbers = #tpu.dot_dimension_numbers<[1], [0], [0], [1], [0, 0, 1, 1], [], []>} : vector<8x64xf32>, vector<64x32xf32>, vector<8x32xf32> -> vector<8x32xf32>
    %45 = tpu.concatenate %15, %44 in 1 : vector<8x32xf32>, vector<8x32xf32> -> vector<8x64xf32>
    %c0_19 = arith.constant 0 : index
    %c0_20 = arith.constant 0 : index
    %46 = vector.load %arg5[%c0_19, %c0_20] : memref<64x32xf32, #tpu.memory_space<vmem>>, vector<64x32xf32>
    %cst_21 = arith.constant dense<0.000000e+00> : vector<8x32xf32>
    %47 = tpu.matmul %45, %46, %cst_21 {dimension_numbers = #tpu.dot_dimension_numbers<[1], [0], [0], [1], [0, 0, 1, 1], [], []>} : vector<8x64xf32>, vector<64x32xf32>, vector<8x32xf32> -> vector<8x32xf32>
    %c0_22 = arith.constant 0 : index
    %c0_23 = arith.constant 0 : index
    %48 = vector.load %arg6[%c0_22, %c0_23] : memref<1x32xf32, #tpu.memory_space<vmem>>, vector<1x32xf32>
    %49 = vector.broadcast %48 : vector<1x32xf32> to vector<8x32xf32>
    %50 = arith.addf %47, %49 : vector<8x32xf32>
    %cst_24 = arith.constant 0.000000e+00 : f32
    %51 = vector.broadcast %cst_24 : f32 to vector<8x32xf32>
    %52 = arith.maximumf %50, %51 : vector<8x32xf32>
    %c0_25 = arith.constant 0 : index
    %c0_26 = arith.constant 0 : index
    %53 = vector.load %arg7[%c0_25, %c0_26] : memref<32x32xf32, #tpu.memory_space<vmem>>, vector<32x32xf32>
    %cst_27 = arith.constant dense<0.000000e+00> : vector<8x32xf32>
    %54 = tpu.matmul %52, %53, %cst_27 {dimension_numbers = #tpu.dot_dimension_numbers<[1], [0], [0], [1], [0, 0, 1, 1], [], []>} : vector<8x32xf32>, vector<32x32xf32>, vector<8x32xf32> -> vector<8x32xf32>
    %c0_28 = arith.constant 0 : index
    %c0_29 = arith.constant 0 : index
    %55 = vector.load %arg8[%c0_28, %c0_29] : memref<1x32xf32, #tpu.memory_space<vmem>>, vector<1x32xf32>
    %56 = vector.broadcast %55 : vector<1x32xf32> to vector<8x32xf32>
    %57 = arith.addf %54, %56 : vector<8x32xf32>
    %cst_30 = arith.constant 0.000000e+00 : f32
    %58 = vector.broadcast %cst_30 : f32 to vector<8x32xf32>
    %59 = arith.maximumf %57, %58 : vector<8x32xf32>
    %60 = arith.addf %59, %0 : vector<8x32xf32>
    %c0_31 = arith.constant 0 : index
    %c0_32 = arith.constant 0 : index
    %61 = vector.load %arg9[%c0_31, %c0_32] : memref<8x32xf32, #tpu.memory_space<vmem>>, vector<8x32xf32>
    tpu.vector_store %arg9[%c0_31, %c0_32], %60 {strides = array<i32>} : memref<8x32xf32, #tpu.memory_space<vmem>>, vector<8x32xf32>,
    return
  }
  func.func @transform_0(%arg0: i32) -> (i32, i32, i32) {
    %c0_i32 = arith.constant 0 : i32
    %c0_i32_0 = arith.constant 0 : i32
    %c0_i32_1 = arith.constant 0 : i32
    return %c0_i32, %arg0, %c0_i32_0 : i32, i32, i32
  }
  func.func @transform_1(%arg0: i32) -> (i32, i32) {
    %c0_i32 = arith.constant 0 : i32
    %c0_i32_0 = arith.constant 0 : i32
    return %arg0, %c0_i32 : i32, i32
  }
  func.func @transform_2(%arg0: i32) -> (i32, i32) {
    %c0_i32 = arith.constant 0 : i32
    %c0_i32_0 = arith.constant 0 : i32
    %c0_i32_1 = arith.constant 0 : i32
    return %c0_i32, %c0_i32_0 : i32, i32
  }
  func.func @transform_3(%arg0: i32) -> (i32, i32) {
    %c0_i32 = arith.constant 0 : i32
    %c0_i32_0 = arith.constant 0 : i32
    %c0_i32_1 = arith.constant 0 : i32
    return %c0_i32, %c0_i32_0 : i32, i32
  }
  func.func @transform_4(%arg0: i32) -> (i32, i32) {
    %c0_i32 = arith.constant 0 : i32
    %c0_i32_0 = arith.constant 0 : i32
    %c0_i32_1 = arith.constant 0 : i32
    return %c0_i32, %c0_i32_0 : i32, i32
  }
  func.func @transform_5(%arg0: i32) -> (i32, i32) {
    %c0_i32 = arith.constant 0 : i32
    %c0_i32_0 = arith.constant 0 : i32
    %c0_i32_1 = arith.constant 0 : i32
    return %c0_i32, %c0_i32_0 : i32, i32
  }
  func.func @transform_6(%arg0: i32) -> (i32, i32) {
    %c0_i32 = arith.constant 0 : i32
    %c0_i32_0 = arith.constant 0 : i32
    %c0_i32_1 = arith.constant 0 : i32
    return %c0_i32, %c0_i32_0 : i32, i32
  }
  func.func @transform_7(%arg0: i32) -> (i32, i32) {
    %c0_i32 = arith.constant 0 : i32
    %c0_i32_0 = arith.constant 0 : i32
    %c0_i32_1 = arith.constant 0 : i32
    return %c0_i32, %c0_i32_0 : i32, i32
  }
  func.func @transform_8(%arg0: i32) -> (i32, i32) {
    %c0_i32 = arith.constant 0 : i32
    %c0_i32_0 = arith.constant 0 : i32
    return %arg0, %c0_i32 : i32, i32
  }
}

</mosaic_0001>

<llo_original>
// kernel: layer_rgat_forward.3
$region0: #{layer_rgat_forward.3}
  #allocation0 [shape = 'u32[]', space=smem, size = 0x4, offset = 0x4, fixed_abs, tag = 'smem constant byte address 0x4 - core index']
  #allocation1 [shape = 'u32[144,128]{1,0:T(1,128)}', space=vmem, size = 0x12000, scoped, tag = 'internal scratch']
  %s0 = inlined_call_operand.vmem [shape: f32[3,8,4], index: 0, kind: input, shape index: {}]
  %s1 = inlined_call_operand.vmem [shape: f32[8,32], index: 1, kind: input, shape index: {}]
  %s2 = inlined_call_operand.vmem [shape: f32[32,32], index: 2, kind: input, shape index: {}]
  %s3 = inlined_call_operand.vmem [shape: f32[64,32], index: 3, kind: input, shape index: {}]
  %s4 = inlined_call_operand.vmem [shape: f32[64,32], index: 4, kind: input, shape index: {}]
  %s5 = inlined_call_operand.vmem [shape: f32[1,32], index: 5, kind: input, shape index: {}]
  %s6 = inlined_call_operand.vmem [shape: f32[32,32], index: 6, kind: input, shape index: {}]
  %s7 = inlined_call_operand.vmem [shape: f32[1,32], index: 7, kind: input, shape index: {}]
  %s8 = inlined_call_operand.hbm [shape: f32[8,32], index: 8, kind: output, shape index: {}]
  %s9 = sld [smem:[#allocation0]]
  $region42: #{layer_rgat_forward.3} parent=0
    _
  %s11 = ssub.s32 1, %s9
  %s12 = scalar_select 0, %s11, %s9
  $region1: #{layer_rgat_forward.3} parent=0
    #allocation2 [shape = 'u8[4096]{0}', space=vmem, size = 0x1000, scoped, tag = 'output window, operand 0, single buffered']
    #allocation3 [shape = 's32[1]{0}', space=sflag, size = 0x4, scoped, tag = 'scoped memory for layer_rgat_forward.3']
    %13 = vsyncpa [#allocation3], 0
    // Predicated region
    $region2: #{layer_rgat_forward.3} parent=1 // pred_check
      _
    $region3: #{layer_rgat_forward.3} parent=1 // pred_check_branch
      %15 = sbr.rel (0) target = $region5
    $region4: #{layer_rgat_forward.3} parent=1 // pred_region
      _
    $region5: #{layer_rgat_forward.3} parent=1 // pred_fallthru
      _
    // Predicated region
    $region6: #{layer_rgat_forward.3} parent=1 // pred_check
      _
    $region7: #{layer_rgat_forward.3} parent=1 // pred_check_branch
      %17 = sbr.rel (0) target = $region9
    $region8: #{layer_rgat_forward.3} parent=1 // pred_region
      _
    $region9: #{layer_rgat_forward.3} parent=1 // pred_fallthru
      _
    // Predicated region
    $region10: #{layer_rgat_forward.3} parent=1 // pred_check
      _
    $region11: #{layer_rgat_forward.3} parent=1 // pred_check_branch
      %19 = sbr.rel (0) target = $region13
    $region12: #{layer_rgat_forward.3} parent=1 // pred_region
      _
    $region13: #{layer_rgat_forward.3} parent=1 // pred_fallthru
      _
    // Predicated region
    $region14: #{layer_rgat_forward.3} parent=1 // pred_check
      _
    $region15: #{layer_rgat_forward.3} parent=1 // pred_check_branch
      %21 = sbr.rel (0) target = $region17
    $region16: #{layer_rgat_forward.3} parent=1 // pred_region
      _
    $region17: #{layer_rgat_forward.3} parent=1 // pred_fallthru
      _
    // Predicated region
    $region18: #{layer_rgat_forward.3} parent=1 // pred_check
      _
    $region19: #{layer_rgat_forward.3} parent=1 // pred_check_branch
      %23 = sbr.rel (0) target = $region21
    $region20: #{layer_rgat_forward.3} parent=1 // pred_region
      _
    $region21: #{layer_rgat_forward.3} parent=1 // pred_fallthru
      _
    // Predicated region
    $region22: #{layer_rgat_forward.3} parent=1 // pred_check
      _
    $region23: #{layer_rgat_forward.3} parent=1 // pred_check_branch
      %25 = sbr.rel (0) target = $region25
    $region24: #{layer_rgat_forward.3} parent=1 // pred_region
      _
    $region25: #{layer_rgat_forward.3} parent=1 // pred_fallthru
      _
    // Predicated region
    $region26: #{layer_rgat_forward.3} parent=1 // pred_check
      _
    $region27: #{layer_rgat_forward.3} parent=1 // pred_check_branch
      %27 = sbr.rel (0) target = $region29
    $region28: #{layer_rgat_forward.3} parent=1 // pred_region
      _
    $region29: #{layer_rgat_forward.3} parent=1 // pred_fallthru
      _
    // Predicated region
    $region30: #{layer_rgat_forward.3} parent=1 // pred_check
      _
    $region31: #{layer_rgat_forward.3} parent=1 // pred_check_branch
      %29 = sbr.rel (0) target = $region33
    $region32: #{layer_rgat_forward.3} parent=1 // pred_region
      _
    $region33: #{layer_rgat_forward.3} parent=1 // pred_fallthru
      _
    %v30 = vld [vmem:[%s1] sm:$0xff]
    %s31 = scalar_lea.vmem %s0, 16
    %v32 = vld [vmem:[%s31] sm:$0xff]
    %vm33 = vcmask 31744
    %v34 = vsel %vm33, %v32, -inf
    %35 = vmax.xlane.f32.xlu0 %v34
    %v36 = vpop.xlane.xlu0 %35
    %v37 = vsub.f32 %v32, %v36
    %v38 = vmul.f32 %v37, 1.442695
    %v39 = vpow.pop %v38
    %v40 = vsel %vm33, %v39, 0.0
    %41 = vadd.xlane.f32.xlu0 %v40
    %v42 = vpop.xlane.xlu0 %41
    %v43 = vrcp.pop %v42
    %v44 = vmul.f32 %v42, %v43
    %v45 = vmul.f32 %v30, %v44
    %v46 = vld [vmem:[%s2] sm:$0xff]
    %v47 = vld [vmem:[%s2 + $0x8] sm:$0xff]
    %v48 = vld [vmem:[%s2 + $0x10] sm:$0xff]
    %v49 = vld [vmem:[%s2 + $0x18] sm:$0xff]
    %vm50 = vcmask 261120
    %v52 = vsel %vm50, %v45, 0
    %54 = vmatprep.subr.mxu0 0.0
    %55 = vmatpush1.msra.mxu0 %v46
    %56 = vmatprep.subr.mxu0 0.0
    %57 = vmatpush1.msra.mxu0 %v47
    %58 = vmatprep.subr.mxu0 0.0
    %59 = vmatpush1.msra.mxu0 %v48
    %60 = vmatprep.subr.mxu0 0.0
    %61 = vmatpush1.msra.mxu0 %v49
    %62 = vmatprep.subr.mxu0 0.0
    %63 = vmatpush1.msra.mxu0 0.0
    %64 = vmatprep.subr.mxu0 0.0
    %65 = vmatpush1.msra.mxu0 0.0
    %66 = vmatprep.subr.mxu0 0.0
    %67 = vmatpush1.msra.mxu0 0.0
    %68 = vmatprep.subr.mxu0 0.0
    %69 = vmatpush1.msra.mxu0 0.0
    %70 = vmatprep.subr.mxu0 0.0
    %71 = vmatpush1.msra.mxu0 0.0
    %72 = vmatprep.subr.mxu0 0.0
    %73 = vmatpush1.msra.mxu0 0.0
    %74 = vmatprep.subr.mxu0 0.0
    %75 = vmatpush1.msra.mxu0 0.0
    %76 = vmatprep.subr.mxu0 0.0
    %77 = vmatpush1.msra.mxu0 0.0
    %78 = vmatprep.subr.mxu0 0.0
    %79 = vmatpush1.msra.mxu0 0.0
    %80 = vmatprep.subr.mxu0 0.0
    %81 = vmatpush1.msra.mxu0 0.0
    %82 = vmatprep.subr.mxu0 0.0
    %83 = vmatpush1.msra.mxu0 0.0
    %84 = vmatprep.subr.mxu0 0.0
    %85 = vmatpush1.msra.mxu0 0.0
    %86 = vmatprep.subr.mxu0 0.0
    %87 = vmatpush1.msra.mxu0 0.0
    %88 = vmatprep.subr.mxu0 0.0
    %89 = vmatpush1.msra.mxu0 0.0
    %90 = vmatprep.subr.mxu0 0.0
    %91 = vmatpush1.msra.mxu0 0.0
    %92 = vmatprep.subr.mxu0 0.0
    %93 = vmatpush1.msra.mxu0 0.0
    %94 = vmatprep.subr.mxu0 0.0
    %95 = vmatpush1.msra.mxu0 0.0
    %96 = vmatprep.subr.mxu0 0.0
    %97 = vmatpush1.msra.mxu0 0.0
    %98 = vmatprep.subr.mxu0 0.0
    %99 = vmatpush1.msra.mxu0 0.0
    %100 = vmatprep.subr.mxu0 0.0
    %101 = vmatpush1.msra.mxu0 0.0
    %102 = vmatprep.subr.mxu0 0.0
    %103 = vmatpush1.msra.mxu0 0.0
    %104 = vmatprep.subr.mxu0 0.0
    %105 = vmatpush1.msra.mxu0 0.0
    %106 = vmatprep.subr.mxu0 0.0
    %107 = vmatpush1.msra.mxu0 0.0
    %108 = vmatprep.subr.mxu0 0.0
    %109 = vmatpush1.msra.mxu0 0.0
    %110 = vmatprep.subr.mxu0 0.0
    %111 = vmatpush1.msra.mxu0 0.0
    %112 = vmatprep.subr.mxu0 0.0
    %113 = vmatpush1.msra.mxu0 0.0
    %114 = vmatprep.subr.mxu0 0.0
    %115 = vmatpush1.msra.mxu0 0.0
    %116 = vmatprep.subr.mxu0 0.0
    %117 = vmatpush1.msra.mxu0 0.0
    %118 = vmatprep.mubr.f32.mxu0 0.0
    %119 = vmatmul.mubr.f32.gmra.mrb[0].mxu0 %v52
    %v120 = vpop.f32.mrb[0].mxu0
    %v121 = vadd.f32 0.0, %v120
    %v122 = vpop.f32.mrb[0].mxu0
    %123 = vdwg.mxu0
    %v124 = vld [vmem:[%s0] sm:$0xff]
    %v125 = vsel %vm33, %v124, -inf
    %126 = vmax.xlane.f32.xlu0 %v125
    %v127 = vpop.xlane.xlu0 %126
    %v128 = vsub.f32 %v124, %v127
    %v129 = vmul.f32 %v128, 1.442695
    %v130 = vpow.pop %v129
    %v131 = vsel %vm33, %v130, 0.0
    %132 = vadd.xlane.f32.xlu0 %v131
    %v133 = vpop.xlane.xlu0 %132
    %v134 = vrcp.pop %v133
    %v135 = vmul.f32 %v133, %v134
    %v136 = vmul.f32 %v30, %v135
    %s137 = scalar_lea.vmem %s0, 8
    %v138 = vld [vmem:[%s137] sm:$0xff]
    %v139 = vsel %vm33, %v138, -inf
    %140 = vmax.xlane.f32.xlu0 %v139
    %v141 = vpop.xlane.xlu0 %140
    %v142 = vsub.f32 %v138, %v141
    %v143 = vmul.f32 %v142, 1.442695
    %v144 = vpow.pop %v143
    %v145 = vsel %vm33, %v144, 0.0
    %146 = vadd.xlane.f32.xlu0 %v145
    %v147 = vpop.xlane.xlu0 %146
    %v148 = vrcp.pop %v147
    %v149 = vmul.f32 %v147, %v148
    %v150 = vmul.f32 %v30, %v149
    %152 = vrot.lane.b32.xlu0 %v150, 32
    %v153 = vpop.permute.xlu0 %152
    %v155 = vsel %vm50, %v136, %v153
    %v156 = vld [vmem:[%s3] sm:$0xff]
    %v157 = vld [vmem:[%s3 + $0x8] sm:$0xff]
    %v158 = vld [vmem:[%s3 + $0x10] sm:$0xff]
    %v159 = vld [vmem:[%s3 + $0x18] sm:$0xff]
    %v160 = vld [vmem:[%s3 + $0x20] sm:$0xff]
    %v161 = vld [vmem:[%s3 + $0x28] sm:$0xff]
    %v162 = vld [vmem:[%s3 + $0x30] sm:$0xff]
    %v163 = vld [vmem:[%s3 + $0x38] sm:$0xff]
    %vm164 = vcmask 523264
    %v166 = vsel %vm164, %v155, 0
    %168 = vmatprep.subr.mxu0 0.0
    %169 = vmatpush1.msra.mxu0 %v156
    %170 = vmatprep.subr.mxu0 0.0
    %171 = vmatpush1.msra.mxu0 %v157
    %172 = vmatprep.subr.mxu0 0.0
    %173 = vmatpush1.msra.mxu0 %v158
    %174 = vmatprep.subr.mxu0 0.0
    %175 = vmatpush1.msra.mxu0 %v159
    %176 = vmatprep.subr.mxu0 0.0
    %177 = vmatpush1.msra.mxu0 %v160
    %178 = vmatprep.subr.mxu0 0.0
    %179 = vmatpush1.msra.mxu0 %v161
    %180 = vmatprep.subr.mxu0 0.0
    %181 = vmatpush1.msra.mxu0 %v162
    %182 = vmatprep.subr.mxu0 0.0
    %183 = vmatpush1.msra.mxu0 %v163
    %184 = vmatprep.subr.mxu0 0.0
    %185 = vmatpush1.msra.mxu0 0.0
    %186 = vmatprep.subr.mxu0 0.0
    %187 = vmatpush1.msra.mxu0 0.0
    %188 = vmatprep.subr.mxu0 0.0
    %189 = vmatpush1.msra.mxu0 0.0
    %190 = vmatprep.subr.mxu0 0.0
    %191 = vmatpush1.msra.mxu0 0.0
    %192 = vmatprep.subr.mxu0 0.0
    %193 = vmatpush1.msra.mxu0 0.0
    %194 = vmatprep.subr.mxu0 0.0
    %195 = vmatpush1.msra.mxu0 0.0
    %196 = vmatprep.subr.mxu0 0.0
    %197 = vmatpush1.msra.mxu0 0.0
    %198 = vmatprep.subr.mxu0 0.0
    %199 = vmatpush1.msra.mxu0 0.0
    %200 = vmatprep.subr.mxu0 0.0
    %201 = vmatpush1.msra.mxu0 0.0
    %202 = vmatprep.subr.mxu0 0.0
    %203 = vmatpush1.msra.mxu0 0.0
    %204 = vmatprep.subr.mxu0 0.0
    %205 = vmatpush1.msra.mxu0 0.0
    %206 = vmatprep.subr.mxu0 0.0
    %207 = vmatpush1.msra.mxu0 0.0
    %208 = vmatprep.subr.mxu0 0.0
    %209 = vmatpush1.msra.mxu0 0.0
    %210 = vmatprep.subr.mxu0 0.0
    %211 = vmatpush1.msra.mxu0 0.0
    %212 = vmatprep.subr.mxu0 0.0
    %213 = vmatpush1.msra.mxu0 0.0
    %214 = vmatprep.subr.mxu0 0.0
    %215 = vmatpush1.msra.mxu0 0.0
    %216 = vmatprep.subr.mxu0 0.0
    %217 = vmatpush1.msra.mxu0 0.0
    %218 = vmatprep.subr.mxu0 0.0
    %219 = vmatpush1.msra.mxu0 0.0
    %220 = vmatprep.subr.mxu0 0.0
    %221 = vmatpush1.msra.mxu0 0.0
    %222 = vmatprep.subr.mxu0 0.0
    %223 = vmatpush1.msra.mxu0 0.0
    %224 = vmatprep.subr.mxu0 0.0
    %225 = vmatpush1.msra.mxu0 0.0
    %226 = vmatprep.subr.mxu0 0.0
    %227 = vmatpush1.msra.mxu0 0.0
    %228 = vmatprep.subr.mxu0 0.0
    %229 = vmatpush1.msra.mxu0 0.0
    %230 = vmatprep.subr.mxu0 0.0
    %231 = vmatpush1.msra.mxu0 0.0
    %232 = vmatprep.mubr.f32.mxu0 0.0
    %233 = vmatmul.mubr.f32.gmra.mrb[0].mxu0 %v166
    %v234 = vpop.f32.mrb[0].mxu0
    %v235 = vadd.f32 0.0, %v234
    %v236 = vpop.f32.mrb[0].mxu0
    %237 = vdwg.mxu0
    %239 = vrot.lane.b32.xlu0 %v235, 32
    %v240 = vpop.permute.xlu0 %239
    %v242 = vsel %vm50, %v121, %v240
    %v243 = vld [vmem:[%s4] sm:$0xff]
    %v244 = vld [vmem:[%s4 + $0x8] sm:$0xff]
    %v245 = vld [vmem:[%s4 + $0x10] sm:$0xff]
    %v246 = vld [vmem:[%s4 + $0x18] sm:$0xff]
    %v247 = vld [vmem:[%s4 + $0x20] sm:$0xff]
    %v248 = vld [vmem:[%s4 + $0x28] sm:$0xff]
    %v249 = vld [vmem:[%s4 + $0x30] sm:$0xff]
    %v250 = vld [vmem:[%s4 + $0x38] sm:$0xff]
    %v251 = vld [vmem:[%s5] sm:$0x1]
    %v253 = vlaneseq
    %v254 = vshrl.u32 %v253, 7
    %v255 = vsub.s32 0, %v254
    %v256 = vrot.slane %v251, %v255
    %v259 = vsel %vm164, %v242, 0
    %261 = vmatprep.subr.mxu0 0.0
    %262 = vmatpush1.msra.mxu0 %v243
    %263 = vmatprep.subr.mxu0 0.0
    %264 = vmatpush1.msra.mxu0 %v244
    %265 = vmatprep.subr.mxu0 0.0
    %266 = vmatpush1.msra.mxu0 %v245
    %267 = vmatprep.subr.mxu0 0.0
    %268 = vmatpush1.msra.mxu0 %v246
    %269 = vmatprep.subr.mxu0 0.0
    %270 = vmatpush1.msra.mxu0 %v247
    %271 = vmatprep.subr.mxu0 0.0
    %272 = vmatpush1.msra.mxu0 %v248
    %273 = vmatprep.subr.mxu0 0.0
    %274 = vmatpush1.msra.mxu0 %v249
    %275 = vmatprep.subr.mxu0 0.0
    %276 = vmatpush1.msra.mxu0 %v250
    %277 = vmatprep.subr.mxu0 0.0
    %278 = vmatpush1.msra.mxu0 0.0
    %279 = vmatprep.subr.mxu0 0.0
    %280 = vmatpush1.msra.mxu0 0.0
    %281 = vmatprep.subr.mxu0 0.0
    %282 = vmatpush1.msra.mxu0 0.0
    %283 = vmatprep.subr.mxu0 0.0
    %284 = vmatpush1.msra.mxu0 0.0
    %285 = vmatprep.subr.mxu0 0.0
    %286 = vmatpush1.msra.mxu0 0.0
    %287 = vmatprep.subr.mxu0 0.0
    %288 = vmatpush1.msra.mxu0 0.0
    %289 = vmatprep.subr.mxu0 0.0
    %290 = vmatpush1.msra.mxu0 0.0
    %291 = vmatprep.subr.mxu0 0.0
    %292 = vmatpush1.msra.mxu0 0.0
    %293 = vmatprep.subr.mxu0 0.0
    %294 = vmatpush1.msra.mxu0 0.0
    %295 = vmatprep.subr.mxu0 0.0
    %296 = vmatpush1.msra.mxu0 0.0
    %297 = vmatprep.subr.mxu0 0.0
    %298 = vmatpush1.msra.mxu0 0.0
    %299 = vmatprep.subr.mxu0 0.0
    %300 = vmatpush1.msra.mxu0 0.0
    %301 = vmatprep.subr.mxu0 0.0
    %302 = vmatpush1.msra.mxu0 0.0
    %303 = vmatprep.subr.mxu0 0.0
    %304 = vmatpush1.msra.mxu0 0.0
    %305 = vmatprep.subr.mxu0 0.0
    %306 = vmatpush1.msra.mxu0 0.0
    %307 = vmatprep.subr.mxu0 0.0
    %308 = vmatpush1.msra.mxu0 0.0
    %309 = vmatprep.subr.mxu0 0.0
    %310 = vmatpush1.msra.mxu0 0.0
    %311 = vmatprep.subr.mxu0 0.0
    %312 = vmatpush1.msra.mxu0 0.0
    %313 = vmatprep.subr.mxu0 0.0
    %314 = vmatpush1.msra.mxu0 0.0
    %315 = vmatprep.subr.mxu0 0.0
    %316 = vmatpush1.msra.mxu0 0.0
    %317 = vmatprep.subr.mxu0 0.0
    %318 = vmatpush1.msra.mxu0 0.0
    %319 = vmatprep.subr.mxu0 0.0
    %320 = vmatpush1.msra.mxu0 0.0
    %321 = vmatprep.subr.mxu0 0.0
    %322 = vmatpush1.msra.mxu0 0.0
    %323 = vmatprep.subr.mxu0 0.0
    %324 = vmatpush1.msra.mxu0 0.0
    %325 = vmatprep.mubr.f32.mxu0 0.0
    %326 = vmatmul.mubr.f32.gmra.mrb[0].mxu0 %v259
    %v327 = vpop.f32.mrb[0].mxu0
    %v328 = vadd.f32 %v256, %v327
    %v329 = vpop.f32.mrb[0].mxu0
    %330 = vdwg.mxu0
    %v331 = vmax.f32 %v328, 0.0
    %v332 = vld [vmem:[%s6] sm:$0xff]
    %v333 = vld [vmem:[%s6 + $0x8] sm:$0xff]
    %v334 = vld [vmem:[%s6 + $0x10] sm:$0xff]
    %v335 = vld [vmem:[%s6 + $0x18] sm:$0xff]
    %v336 = vld [vmem:[%s7] sm:$0x1]
    %v338 = vlaneseq
    %v339 = vshrl.u32 %v338, 7
    %v340 = vsub.s32 0, %v339
    %v341 = vrot.slane %v336, %v340
    %v344 = vsel %vm50, %v331, 0
    %346 = vmatprep.subr.mxu0 0.0
    %347 = vmatpush1.msra.mxu0 %v332
    %348 = vmatprep.subr.mxu0 0.0
    %349 = vmatpush1.msra.mxu0 %v333
    %350 = vmatprep.subr.mxu0 0.0
    %351 = vmatpush1.msra.mxu0 %v334
    %352 = vmatprep.subr.mxu0 0.0
    %353 = vmatpush1.msra.mxu0 %v335
    %354 = vmatprep.subr.mxu0 0.0
    %355 = vmatpush1.msra.mxu0 0.0
    %356 = vmatprep.subr.mxu0 0.0
    %357 = vmatpush1.msra.mxu0 0.0
    %358 = vmatprep.subr.mxu0 0.0
    %359 = vmatpush1.msra.mxu0 0.0
    %360 = vmatprep.subr.mxu0 0.0
    %361 = vmatpush1.msra.mxu0 0.0
    %362 = vmatprep.subr.mxu0 0.0
    %363 = vmatpush1.msra.mxu0 0.0
    %364 = vmatprep.subr.mxu0 0.0
    %365 = vmatpush1.msra.mxu0 0.0
    %366 = vmatprep.subr.mxu0 0.0
    %367 = vmatpush1.msra.mxu0 0.0
    %368 = vmatprep.subr.mxu0 0.0
    %369 = vmatpush1.msra.mxu0 0.0
    %370 = vmatprep.subr.mxu0 0.0
    %371 = vmatpush1.msra.mxu0 0.0
    %372 = vmatprep.subr.mxu0 0.0
    %373 = vmatpush1.msra.mxu0 0.0
    %374 = vmatprep.subr.mxu0 0.0
    %375 = vmatpush1.msra.mxu0 0.0
    %376 = vmatprep.subr.mxu0 0.0
    %377 = vmatpush1.msra.mxu0 0.0
    %378 = vmatprep.subr.mxu0 0.0
    %379 = vmatpush1.msra.mxu0 0.0
    %380 = vmatprep.subr.mxu0 0.0
    %381 = vmatpush1.msra.mxu0 0.0
    %382 = vmatprep.subr.mxu0 0.0
    %383 = vmatpush1.msra.mxu0 0.0
    %384 = vmatprep.subr.mxu0 0.0
    %385 = vmatpush1.msra.mxu0 0.0
    %386 = vmatprep.subr.mxu0 0.0
    %387 = vmatpush1.msra.mxu0 0.0
    %388 = vmatprep.subr.mxu0 0.0
    %389 = vmatpush1.msra.mxu0 0.0
    %390 = vmatprep.subr.mxu0 0.0
    %391 = vmatpush1.msra.mxu0 0.0
    %392 = vmatprep.subr.mxu0 0.0
    %393 = vmatpush1.msra.mxu0 0.0
    %394 = vmatprep.subr.mxu0 0.0
    %395 = vmatpush1.msra.mxu0 0.0
    %396 = vmatprep.subr.mxu0 0.0
    %397 = vmatpush1.msra.mxu0 0.0
    %398 = vmatprep.subr.mxu0 0.0
    %399 = vmatpush1.msra.mxu0 0.0
    %400 = vmatprep.subr.mxu0 0.0
    %401 = vmatpush1.msra.mxu0 0.0
    %402 = vmatprep.subr.mxu0 0.0
    %403 = vmatpush1.msra.mxu0 0.0
    %404 = vmatprep.subr.mxu0 0.0
    %405 = vmatpush1.msra.mxu0 0.0
    %406 = vmatprep.subr.mxu0 0.0
    %407 = vmatpush1.msra.mxu0 0.0
    %408 = vmatprep.subr.mxu0 0.0
    %409 = vmatpush1.msra.mxu0 0.0
    %410 = vmatprep.mubr.f32.mxu0 0.0
    %411 = vmatmul.mubr.f32.gmra.mrb[0].mxu0 %v344
    %v412 = vpop.f32.mrb[0].mxu0
    %v413 = vadd.f32 %v341, %v412
    %v414 = vpop.f32.mrb[0].mxu0
    %415 = vdwg.mxu0
    %v416 = vmax.f32 %v413, 0.0
    %v417 = vadd.f32 %v416, %v30
    %418 = vst.msk [vmem:[#allocation2] sm:$0xff] %vm50, %v417
    // Predicated region
    $region34: #{layer_rgat_forward.3} parent=1 // pred_check
      _
    $region35: #{layer_rgat_forward.3} parent=1 // pred_check_branch
      %420 = sbr.rel (0) target = $region37
    $region36: #{layer_rgat_forward.3} parent=1 // pred_region
      %s422 = ssub.s32 128, 128
      %423 = vsyncadd [#allocation3], %s422
      %s425 = sshll.u32 [#allocation2], 4
      %s426 = int_to_ptr.vmem [resolvable:$true] %s425
      %428 = dma.vmem_to_hbm [thread:$0]  %s426, 128, %s8, [#allocation3]
    $region37: #{layer_rgat_forward.3} parent=1 // pred_fallthru
      _
    // Predicated region
    $region38: #{layer_rgat_forward.3} parent=1 // pred_check
      _
    $region39: #{layer_rgat_forward.3} parent=1 // pred_check_branch
      %430 = sbr.rel (0) target = $region41
    $region40: #{layer_rgat_forward.3} parent=1 // pred_region
      %431 = dma.done [#allocation3], 128
    $region41: #{layer_rgat_forward.3} parent=1 // pred_fallthru
      _
    %432 = vsyncpa [#allocation3], 1

// kernel: layer_rgat_forward.2
$region0: #{layer_rgat_forward.2}
  #allocation0 [shape = 'u32[]', space=smem, size = 0x4, offset = 0x4, fixed_abs, tag = 'smem constant byte address 0x4 - core index']
  #allocation1 [shape = 'u32[144,128]{1,0:T(1,128)}', space=vmem, size = 0x12000, scoped, tag = 'internal scratch']
  %s0 = inlined_call_operand.vmem [shape: f32[32,32], index: 0, kind: input, shape index: {}]
  %s1 = inlined_call_operand.vmem [shape: f32[32,32], index: 1, kind: input, shape index: {}]
  %s2 = inlined_call_operand.vmem [shape: f32[32,16], index: 2, kind: input, shape index: {}]
  %s3 = inlined_call_operand.vmem [shape: f32[16,64], index: 3, kind: input, shape index: {}]
  %s4 = inlined_call_operand.vmem [shape: f32[1,64], index: 4, kind: input, shape index: {}]
  %s5 = inlined_call_operand.vmem [shape: f32[64,2], index: 5, kind: input, shape index: {}]
  %s6 = inlined_call_operand.vmem [shape: f32[1,2], index: 6, kind: input, shape index: {}]
  %s7 = inlined_call_operand.vmem [shape: f32[16,16], index: 7, kind: input, shape index: {}]
  %s8 = inlined_call_operand.vmem [shape: f32[1,16], index: 8, kind: input, shape index: {}]
  %s9 = inlined_call_operand.vmem [shape: f32[32,3], index: 9, kind: output, shape index: {0}]
  %s10 = inlined_call_operand.vmem [shape: f32[32,16], index: 10, kind: output, shape index: {1}]
  %11 = xla_tuple %s9, %s10
  %s12 = sld [smem:[#allocation0]]
  $region54: #{layer_rgat_forward.2} parent=0
    _
  %s14 = ssub.s32 1, %s12
  %s15 = scalar_select 0, %s14, %s12
  // Predicated region
  $region2: #{layer_rgat_forward.2} parent=0 // pred_check
    _
  $region3: #{layer_rgat_forward.2} parent=0 // pred_check_branch
    %17 = sbr.rel (0) target = $region5
  $region4: #{layer_rgat_forward.2} parent=0 // pred_region
    _
  $region5: #{layer_rgat_forward.2} parent=0 // pred_fallthru
    _
  // Predicated region
  $region6: #{layer_rgat_forward.2} parent=0 // pred_check
    _
  $region7: #{layer_rgat_forward.2} parent=0 // pred_check_branch
    %19 = sbr.rel (0) target = $region9
  $region8: #{layer_rgat_forward.2} parent=0 // pred_region
    _
  $region9: #{layer_rgat_forward.2} parent=0 // pred_fallthru
    _
  // Predicated region
  $region10: #{layer_rgat_forward.2} parent=0 // pred_check
    _
  $region11: #{layer_rgat_forward.2} parent=0 // pred_check_branch
    %21 = sbr.rel (0) target = $region13
  $region12: #{layer_rgat_forward.2} parent=0 // pred_region
    _
  $region13: #{layer_rgat_forward.2} parent=0 // pred_fallthru
    _
  // Predicated region
  $region14: #{layer_rgat_forward.2} parent=0 // pred_check
    _
  $region15: #{layer_rgat_forward.2} parent=0 // pred_check_branch
    %23 = sbr.rel (0) target = $region17
  $region16: #{layer_rgat_forward.2} parent=0 // pred_region
    _
  $region17: #{layer_rgat_forward.2} parent=0 // pred_fallthru
    _
  // Predicated region
  $region18: #{layer_rgat_forward.2} parent=0 // pred_check
    _
  $region19: #{layer_rgat_forward.2} parent=0 // pred_check_branch
    %25 = sbr.rel (0) target = $region21
  $region20: #{layer_rgat_forward.2} parent=0 // pred_region
    _
  $region21: #{layer_rgat_forward.2} parent=0 // pred_fallthru
    _
  // Predicated region
  $region22: #{layer_rgat_forward.2} parent=0 // pred_check
    _
  $region23: #{layer_rgat_forward.2} parent=0 // pred_check_branch
    %27 = sbr.rel (0) target = $region25
  $region24: #{layer_rgat_forward.2} parent=0 // pred_region
    _
  $region25: #{layer_rgat_forward.2} parent=0 // pred_fallthru
    _
  // Predicated region
  $region26: #{layer_rgat_forward.2} parent=0 // pred_check
    _
  $region27: #{layer_rgat_forward.2} parent=0 // pred_check_branch
    %29 = sbr.rel (0) target = $region29
  $region28: #{layer_rgat_forward.2} parent=0 // pred_region
    _
  $region29: #{layer_rgat_forward.2} parent=0 // pred_fallthru
    _
  // Predicated region
  $region30: #{layer_rgat_forward.2} parent=0 // pred_check
    _
  $region31: #{layer_rgat_forward.2} parent=0 // pred_check_branch
    %31 = sbr.rel (0) target = $region33
  $region32: #{layer_rgat_forward.2} parent=0 // pred_region
    _
  $region33: #{layer_rgat_forward.2} parent=0 // pred_fallthru
    _
  // Predicated region
  $region34: #{layer_rgat_forward.2} parent=0 // pred_check
    _
  $region35: #{layer_rgat_forward.2} parent=0 // pred_check_branch
    %33 = sbr.rel (0) target = $region37
  $region36: #{layer_rgat_forward.2} parent=0 // pred_region
    _
  $region37: #{layer_rgat_forward.2} parent=0 // pred_fallthru
    _
  %v34 = vld [vmem:[%s2] sm:$0xff]
  %v35 = vld [vmem:[%s2 + $0x8] sm:$0xff]
  %v36 = vld [vmem:[%s2 + $0x10] sm:$0xff]
  %v37 = vld [vmem:[%s2 + $0x18] sm:$0xff]
  %v38 = vld [vmem:[%s0] sm:$0xff]
  %v39 = vld [vmem:[%s0 + $0x8] sm:$0xff]
  %v40 = vld [vmem:[%s0 + $0x10] sm:$0xff]
  %v41 = vld [vmem:[%s0 + $0x18] sm:$0xff]
  %v42 = vld [vmem:[%s1] sm:$0xff]
  %v43 = vld [vmem:[%s1 + $0x8] sm:$0xff]
  %v44 = vld [vmem:[%s1 + $0x10] sm:$0xff]
  %v45 = vld [vmem:[%s1 + $0x18] sm:$0xff]
  %v46 = vmul.f32 %v38, %v42
  %v47 = vmul.f32 %v39, %v43
  %v48 = vmul.f32 %v40, %v44
  %v49 = vmul.f32 %v41, %v45
  %vm50 = vcmask 261120
  %v51 = vsel %vm50, %v46, 0.0
  %52 = vadd.xlane.f32.xlu0 %v51
  %v53 = vpop.xlane.xlu0 %52
  %v54 = vsel %vm50, %v47, 0.0
  %55 = vadd.xlane.f32.xlu0 %v54
  %v56 = vpop.xlane.xlu0 %55
  %v57 = vsel %vm50, %v48, 0.0
  %58 = vadd.xlane.f32.xlu0 %v57
  %v59 = vpop.xlane.xlu0 %58
  %v60 = vsel %vm50, %v49, 0.0
  %61 = vadd.xlane.f32.xlu0 %v60
  %v62 = vpop.xlane.xlu0 %61
  %v63 = vld [vmem:[%s3] sm:$0xff]
  %v64 = vld [vmem:[%s3 + $0x8] sm:$0xff]
  %v65 = vld [vmem:[%s4] sm:$0x1]
  %v67 = vlaneseq
  %v68 = vshrl.u32 %v67, 7
  %v69 = vsub.s32 0, %v68
  %v70 = vrot.slane %v65, %v69
  %vm72 = vcmask 130048
  %v74 = vsel %vm72, %v34, 0
  %v77 = vsel %vm72, %v35, 0
  %v80 = vsel %vm72, %v36, 0
  %v83 = vsel %vm72, %v37, 0
  %85 = vmatprep.subr.mxu0 0.0
  %86 = vmatpush1.msra.mxu0 %v63
  %87 = vmatprep.subr.mxu0 0.0
  %88 = vmatpush1.msra.mxu0 %v64
  %89 = vmatprep.subr.mxu0 0.0
  %90 = vmatpush1.msra.mxu0 0.0
  %91 = vmatprep.subr.mxu0 0.0
  %92 = vmatpush1.msra.mxu0 0.0
  %93 = vmatprep.subr.mxu0 0.0
  %94 = vmatpush1.msra.mxu0 0.0
  %95 = vmatprep.subr.mxu0 0.0
  %96 = vmatpush1.msra.mxu0 0.0
  %97 = vmatprep.subr.mxu0 0.0
  %98 = vmatpush1.msra.mxu0 0.0
  %99 = vmatprep.subr.mxu0 0.0
  %100 = vmatpush1.msra.mxu0 0.0
  %101 = vmatprep.subr.mxu0 0.0
  %102 = vmatpush1.msra.mxu0 0.0
  %103 = vmatprep.subr.mxu0 0.0
  %104 = vmatpush1.msra.mxu0 0.0
  %105 = vmatprep.subr.mxu0 0.0
  %106 = vmatpush1.msra.mxu0 0.0
  %107 = vmatprep.subr.mxu0 0.0
  %108 = vmatpush1.msra.mxu0 0.0
  %109 = vmatprep.subr.mxu0 0.0
  %110 = vmatpush1.msra.mxu0 0.0
  %111 = vmatprep.subr.mxu0 0.0
  %112 = vmatpush1.msra.mxu0 0.0
  %113 = vmatprep.subr.mxu0 0.0
  %114 = vmatpush1.msra.mxu0 0.0
  %115 = vmatprep.subr.mxu0 0.0
  %116 = vmatpush1.msra.mxu0 0.0
  %117 = vmatprep.subr.mxu0 0.0
  %118 = vmatpush1.msra.mxu0 0.0
  %119 = vmatprep.subr.mxu0 0.0
  %120 = vmatpush1.msra.mxu0 0.0
  %121 = vmatprep.subr.mxu0 0.0
  %122 = vmatpush1.msra.mxu0 0.0
  %123 = vmatprep.subr.mxu0 0.0
  %124 = vmatpush1.msra.mxu0 0.0
  %125 = vmatprep.subr.mxu0 0.0
  %126 = vmatpush1.msra.mxu0 0.0
  %127 = vmatprep.subr.mxu0 0.0
  %128 = vmatpush1.msra.mxu0 0.0
  %129 = vmatprep.subr.mxu0 0.0
  %130 = vmatpush1.msra.mxu0 0.0
  %131 = vmatprep.subr.mxu0 0.0
  %132 = vmatpush1.msra.mxu0 0.0
  %133 = vmatprep.subr.mxu0 0.0
  %134 = vmatpush1.msra.mxu0 0.0
  %135 = vmatprep.subr.mxu0 0.0
  %136 = vmatpush1.msra.mxu0 0.0
  %137 = vmatprep.subr.mxu0 0.0
  %138 = vmatpush1.msra.mxu0 0.0
  %139 = vmatprep.subr.mxu0 0.0
  %140 = vmatpush1.msra.mxu0 0.0
  %141 = vmatprep.subr.mxu0 0.0
  %142 = vmatpush1.msra.mxu0 0.0
  %143 = vmatprep.subr.mxu0 0.0
  %144 = vmatpush1.msra.mxu0 0.0
  %145 = vmatprep.subr.mxu0 0.0
  %146 = vmatpush1.msra.mxu0 0.0
  %147 = vmatprep.subr.mxu0 0.0
  %148 = vmatpush1.msra.mxu0 0.0
  %149 = vmatprep.mubr.f32.mxu0 0.0
  %150 = vmatmul.mubr.f32.gmra.mrb[0].mxu0 %v74
  %v151 = vpop.f32.mrb[0].mxu0
  %v152 = vadd.f32 %v70, %v151
  %v153 = vpop.f32.mrb[0].mxu0
  %154 = vmatprep.mubr.f32.mxu0 0.0
  %155 = vmatmul.mubr.f32.gmra.mrb[0].mxu0 %v77
  %v156 = vpop.f32.mrb[0].mxu0
  %v157 = vadd.f32 %v70, %v156
  %v158 = vpop.f32.mrb[0].mxu0
  %159 = vmatprep.mubr.f32.mxu0 0.0
  %160 = vmatmul.mubr.f32.gmra.mrb[0].mxu0 %v80
  %v161 = vpop.f32.mrb[0].mxu0
  %v162 = vadd.f32 %v70, %v161
  %v163 = vpop.f32.mrb[0].mxu0
  %164 = vmatprep.mubr.f32.mxu0 0.0
  %165 = vmatmul.mubr.f32.gmra.mrb[0].mxu0 %v83
  %v166 = vpop.f32.mrb[0].mxu0
  %v167 = vadd.f32 %v70, %v166
  %v168 = vpop.f32.mrb[0].mxu0
  %169 = vdwg.mxu0
  %v170 = vmax.f32 %v152, 0.0
  %v171 = vmax.f32 %v157, 0.0
  %v172 = vmax.f32 %v162, 0.0
  %v173 = vmax.f32 %v167, 0.0
  %v174 = vld [vmem:[%s5] sm:$0xff]
  %v175 = vld [vmem:[%s5 + $0x8] sm:$0xff]
  %v176 = vld [vmem:[%s5 + $0x10] sm:$0xff]
  %v177 = vld [vmem:[%s5 + $0x18] sm:$0xff]
  %v178 = vld [vmem:[%s5 + $0x20] sm:$0xff]
  %v179 = vld [vmem:[%s5 + $0x28] sm:$0xff]
  %v180 = vld [vmem:[%s5 + $0x30] sm:$0xff]
  %v181 = vld [vmem:[%s5 + $0x38] sm:$0xff]
  %v182 = vld [vmem:[%s6] sm:$0x1]
  %v184 = vlaneseq
  %v185 = vshrl.u32 %v184, 7
  %v186 = vsub.s32 0, %v185
  %v187 = vrot.slane %v182, %v186
  %vm189 = vcmask 523264
  %v191 = vsel %vm189, %v170, 0
  %v194 = vsel %vm189, %v171, 0
  %v197 = vsel %vm189, %v172, 0
  %v200 = vsel %vm189, %v173, 0
  %202 = vmatprep.subr.mxu0 0.0
  %203 = vmatpush1.msra.mxu0 %v174
  %204 = vmatprep.subr.mxu0 0.0
  %205 = vmatpush1.msra.mxu0 %v175
  %206 = vmatprep.subr.mxu0 0.0
  %207 = vmatpush1.msra.mxu0 %v176
  %208 = vmatprep.subr.mxu0 0.0
  %209 = vmatpush1.msra.mxu0 %v177
  %210 = vmatprep.subr.mxu0 0.0
  %211 = vmatpush1.msra.mxu0 %v178
  %212 = vmatprep.subr.mxu0 0.0
  %213 = vmatpush1.msra.mxu0 %v179
  %214 = vmatprep.subr.mxu0 0.0
  %215 = vmatpush1.msra.mxu0 %v180
  %216 = vmatprep.subr.mxu0 0.0
  %217 = vmatpush1.msra.mxu0 %v181
  %218 = vmatprep.subr.mxu0 0.0
  %219 = vmatpush1.msra.mxu0 0.0
  %220 = vmatprep.subr.mxu0 0.0
  %221 = vmatpush1.msra.mxu0 0.0
  %222 = vmatprep.subr.mxu0 0.0
  %223 = vmatpush1.msra.mxu0 0.0
  %224 = vmatprep.subr.mxu0 0.0
  %225 = vmatpush1.msra.mxu0 0.0
  %226 = vmatprep.subr.mxu0 0.0
  %227 = vmatpush1.msra.mxu0 0.0
  %228 = vmatprep.subr.mxu0 0.0
  %229 = vmatpush1.msra.mxu0 0.0
  %230 = vmatprep.subr.mxu0 0.0
  %231 = vmatpush1.msra.mxu0 0.0
  %232 = vmatprep.subr.mxu0 0.0
  %233 = vmatpush1.msra.mxu0 0.0
  %234 = vmatprep.subr.mxu0 0.0
  %235 = vmatpush1.msra.mxu0 0.0
  %236 = vmatprep.subr.mxu0 0.0
  %237 = vmatpush1.msra.mxu0 0.0
  %238 = vmatprep.subr.mxu0 0.0
  %239 = vmatpush1.msra.mxu0 0.0
  %240 = vmatprep.subr.mxu0 0.0
  %241 = vmatpush1.msra.mxu0 0.0
  %242 = vmatprep.subr.mxu0 0.0
  %243 = vmatpush1.msra.mxu0 0.0
  %244 = vmatprep.subr.mxu0 0.0
  %245 = vmatpush1.msra.mxu0 0.0
  %246 = vmatprep.subr.mxu0 0.0
  %247 = vmatpush1.msra.mxu0 0.0
  %248 = vmatprep.subr.mxu0 0.0
  %249 = vmatpush1.msra.mxu0 0.0
  %250 = vmatprep.subr.mxu0 0.0
  %251 = vmatpush1.msra.mxu0 0.0
  %252 = vmatprep.subr.mxu0 0.0
  %253 = vmatpush1.msra.mxu0 0.0
  %254 = vmatprep.subr.mxu0 0.0
  %255 = vmatpush1.msra.mxu0 0.0
  %256 = vmatprep.subr.mxu0 0.0
  %257 = vmatpush1.msra.mxu0 0.0
  %258 = vmatprep.subr.mxu0 0.0
  %259 = vmatpush1.msra.mxu0 0.0
  %260 = vmatprep.subr.mxu0 0.0
  %261 = vmatpush1.msra.mxu0 0.0
  %262 = vmatprep.subr.mxu0 0.0
  %263 = vmatpush1.msra.mxu0 0.0
  %264 = vmatprep.subr.mxu0 0.0
  %265 = vmatpush1.msra.mxu0 0.0
  %266 = vmatprep.mubr.f32.mxu0 0.0
  %267 = vmatmul.mubr.f32.gmra.mrb[0].mxu0 %v191
  %v268 = vpop.f32.mrb[0].mxu0
  %v269 = vadd.f32 %v187, %v268
  %v270 = vpop.f32.mrb[0].mxu0
  %271 = vmatprep.mubr.f32.mxu0 0.0
  %272 = vmatmul.mubr.f32.gmra.mrb[0].mxu0 %v194
  %v273 = vpop.f32.mrb[0].mxu0
  %v274 = vadd.f32 %v187, %v273
  %v275 = vpop.f32.mrb[0].mxu0
  %276 = vmatprep.mubr.f32.mxu0 0.0
  %277 = vmatmul.mubr.f32.gmra.mrb[0].mxu0 %v197
  %v278 = vpop.f32.mrb[0].mxu0
  %v279 = vadd.f32 %v187, %v278
  %v280 = vpop.f32.mrb[0].mxu0
  %281 = vmatprep.mubr.f32.mxu0 0.0
  %282 = vmatmul.mubr.f32.gmra.mrb[0].mxu0 %v200
  %v283 = vpop.f32.mrb[0].mxu0
  %v284 = vadd.f32 %v187, %v283
  %v285 = vpop.f32.mrb[0].mxu0
  %286 = vdwg.mxu0
  %v287 = vxor.u32 %v269, 2147483648
  %v288 = vxor.u32 %v274, 2147483648
  %v289 = vxor.u32 %v279, 2147483648
  %v290 = vxor.u32 %v284, 2147483648
  %v291 = vmul.f32 %v287, 1.442695
  %v292 = vpow.pop %v291
  %v293 = vmul.f32 %v288, 1.442695
  %v294 = vpow.pop %v293
  %v295 = vmul.f32 %v289, 1.442695
  %v296 = vpow.pop %v295
  %v297 = vmul.f32 %v290, 1.442695
  %v298 = vpow.pop %v297
  %v299 = vadd.f32 %v292, 1.0
  %v300 = vadd.f32 %v294, 1.0
  %v301 = vadd.f32 %v296, 1.0
  %v302 = vadd.f32 %v298, 1.0
  %v303 = vrcp.pop %v299
  %v304 = vmul.f32 1.0, %v303
  %v305 = vrcp.pop %v300
  %v306 = vmul.f32 1.0, %v305
  %v307 = vrcp.pop %v301
  %v308 = vmul.f32 1.0, %v307
  %v309 = vrcp.pop %v302
  %v310 = vmul.f32 1.0, %v309
  %vm311 = vcmask 15360
  %v312 = vsel %vm311, %v304, %v53
  %v313 = vsel %vm311, %v306, %v56
  %v314 = vsel %vm311, %v308, %v59
  %v315 = vsel %vm311, %v310, %v62
  %vm316 = vcmask 23552
  %317 = vst.msk [vmem:[%s9] sm:$0xff] %vm316, %v312
  %318 = vst.msk [vmem:[%s9 + $0x8] sm:$0xff] %vm316, %v313
  %319 = vst.msk [vmem:[%s9 + $0x10] sm:$0xff] %vm316, %v314
  %320 = vst.msk [vmem:[%s9 + $0x18] sm:$0xff] %vm316, %v315
  %v321 = vld [vmem:[%s7] sm:$0xff]
  %v322 = vld [vmem:[%s7 + $0x8] sm:$0xff]
  %v323 = vld [vmem:[%s8] sm:$0x1]
  %v325 = vlaneseq
  %v326 = vshrl.u32 %v325, 7
  %v327 = vsub.s32 0, %v326
  %v328 = vrot.slane %v323, %v327
  %330 = vmatprep.subr.mxu0 0.0
  %331 = vmatpush1.msra.mxu0 %v321
  %332 = vmatprep.subr.mxu0 0.0
  %333 = vmatpush1.msra.mxu0 %v322
  %334 = vmatprep.subr.mxu0 0.0
  %335 = vmatpush1.msra.mxu0 0.0
  %336 = vmatprep.subr.mxu0 0.0
  %337 = vmatpush1.msra.mxu0 0.0
  %338 = vmatprep.subr.mxu0 0.0
  %339 = vmatpush1.msra.mxu0 0.0
  %340 = vmatprep.subr.mxu0 0.0
  %341 = vmatpush1.msra.mxu0 0.0
  %342 = vmatprep.subr.mxu0 0.0
  %343 = vmatpush1.msra.mxu0 0.0
  %344 = vmatprep.subr.mxu0 0.0
  %345 = vmatpush1.msra.mxu0 0.0
  %346 = vmatprep.subr.mxu0 0.0
  %347 = vmatpush1.msra.mxu0 0.0
  %348 = vmatprep.subr.mxu0 0.0
  %349 = vmatpush1.msra.mxu0 0.0
  %350 = vmatprep.subr.mxu0 0.0
  %351 = vmatpush1.msra.mxu0 0.0
  %352 = vmatprep.subr.mxu0 0.0
  %353 = vmatpush1.msra.mxu0 0.0
  %354 = vmatprep.subr.mxu0 0.0
  %355 = vmatpush1.msra.mxu0 0.0
  %356 = vmatprep.subr.mxu0 0.0
  %357 = vmatpush1.msra.mxu0 0.0
  %358 = vmatprep.subr.mxu0 0.0
  %359 = vmatpush1.msra.mxu0 0.0
  %360 = vmatprep.subr.mxu0 0.0
  %361 = vmatpush1.msra.mxu0 0.0
  %362 = vmatprep.subr.mxu0 0.0
  %363 = vmatpush1.msra.mxu0 0.0
  %364 = vmatprep.subr.mxu0 0.0
  %365 = vmatpush1.msra.mxu0 0.0
  %366 = vmatprep.subr.mxu0 0.0
  %367 = vmatpush1.msra.mxu0 0.0
  %368 = vmatprep.subr.mxu0 0.0
  %369 = vmatpush1.msra.mxu0 0.0
  %370 = vmatprep.subr.mxu0 0.0
  %371 = vmatpush1.msra.mxu0 0.0
  %372 = vmatprep.subr.mxu0 0.0
  %373 = vmatpush1.msra.mxu0 0.0
  %374 = vmatprep.subr.mxu0 0.0
  %375 = vmatpush1.msra.mxu0 0.0
  %376 = vmatprep.subr.mxu0 0.0
  %377 = vmatpush1.msra.mxu0 0.0
  %378 = vmatprep.subr.mxu0 0.0
  %379 = vmatpush1.msra.mxu0 0.0
  %380 = vmatprep.subr.mxu0 0.0
  %381 = vmatpush1.msra.mxu0 0.0
  %382 = vmatprep.subr.mxu0 0.0
  %383 = vmatpush1.msra.mxu0 0.0
  %384 = vmatprep.subr.mxu0 0.0
  %385 = vmatpush1.msra.mxu0 0.0
  %386 = vmatprep.subr.mxu0 0.0
  %387 = vmatpush1.msra.mxu0 0.0
  %388 = vmatprep.subr.mxu0 0.0
  %389 = vmatpush1.msra.mxu0 0.0
  %390 = vmatprep.subr.mxu0 0.0
  %391 = vmatpush1.msra.mxu0 0.0
  %392 = vmatprep.subr.mxu0 0.0
  %393 = vmatpush1.msra.mxu0 0.0
  %394 = vmatprep.mubr.f32.mxu0 0.0
  %395 = vmatmul.mubr.f32.gmra.mrb[0].mxu0 %v74
  %v396 = vpop.f32.mrb[0].mxu0
  %v397 = vadd.f32 %v328, %v396
  %v398 = vpop.f32.mrb[0].mxu0
  %399 = vmatprep.mubr.f32.mxu0 0.0
  %400 = vmatmul.mubr.f32.gmra.mrb[0].mxu0 %v77
  %v401 = vpop.f32.mrb[0].mxu0
  %v402 = vadd.f32 %v328, %v401
  %v403 = vpop.f32.mrb[0].mxu0
  %404 = vmatprep.mubr.f32.mxu0 0.0
  %405 = vmatmul.mubr.f32.gmra.mrb[0].mxu0 %v80
  %v406 = vpop.f32.mrb[0].mxu0
  %v407 = vadd.f32 %v328, %v406
  %v408 = vpop.f32.mrb[0].mxu0
  %409 = vmatprep.mubr.f32.mxu0 0.0
  %410 = vmatmul.mubr.f32.gmra.mrb[0].mxu0 %v83
  %v411 = vpop.f32.mrb[0].mxu0
  %v412 = vadd.f32 %v328, %v411
  %v413 = vpop.f32.mrb[0].mxu0
  %414 = vdwg.mxu0
  %v415 = vmax.f32 %v397, 0.0
  %v416 = vmax.f32 %v402, 0.0
  %v417 = vmax.f32 %v407, 0.0
  %v418 = vmax.f32 %v412, 0.0
  %v419 = vadd.f32 %v415, %v34
  %v420 = vadd.f32 %v416, %v35
  %v421 = vadd.f32 %v417, %v36
  %v422 = vadd.f32 %v418, %v37
  %423 = vst.msk [vmem:[%s10] sm:$0xff] %vm72, %v419
  %424 = vst.msk [vmem:[%s10 + $0x8] sm:$0xff] %vm72, %v420
  %425 = vst.msk [vmem:[%s10 + $0x10] sm:$0xff] %vm72, %v421
  %426 = vst.msk [vmem:[%s10 + $0x18] sm:$0xff] %vm72, %v422
  // Predicated region
  $region38: #{layer_rgat_forward.2} parent=0 // pred_check
    _
  $region39: #{layer_rgat_forward.2} parent=0 // pred_check_branch
    %428 = sbr.rel (0) target = $region41
  $region40: #{layer_rgat_forward.2} parent=0 // pred_region
    _
  $region41: #{layer_rgat_forward.2} parent=0 // pred_fallthru
    _
  // Predicated region
  $region42: #{layer_rgat_forward.2} parent=0 // pred_check
    _
  $region43: #{layer_rgat_forward.2} parent=0 // pred_check_branch
    %430 = sbr.rel (0) target = $region45
  $region44: #{layer_rgat_forward.2} parent=0 // pred_region
    _
  $region45: #{layer_rgat_forward.2} parent=0 // pred_fallthru
    _
  // Predicated region
  $region46: #{layer_rgat_forward.2} parent=0 // pred_check
    _
  $region47: #{layer_rgat_forward.2} parent=0 // pred_check_branch
    %432 = sbr.rel (0) target = $region49
  $region48: #{layer_rgat_forward.2} parent=0 // pred_region
    _
  $region49: #{layer_rgat_forward.2} parent=0 // pred_fallthru
    _
  // Predicated region
  $region50: #{layer_rgat_forward.2} parent=0 // pred_check
    _
  $region51: #{layer_rgat_forward.2} parent=0 // pred_check_branch
    %434 = sbr.rel (0) target = $region53
  $region52: #{layer_rgat_forward.2} parent=0 // pred_region
    _
  $region53: #{layer_rgat_forward.2} parent=0 // pred_fallthru
    _

</llo_original>
